<compile_context>
chip_gen: v7x
topology: tpu7x:2x2x1
jax: 0.10.0
libtpu: 0.0.40
codegen_flags: <defaults>
</compile_context>

<pallas_src>
import functools

import jax
import jax.numpy as jnp
from jax.experimental import pallas as pl
from jax.experimental.pallas import tpu as pltpu

LATENT_DIM = 128
CONDITION_DIM = 4
VMEM_LIMIT = 32 * 1024 * 1024          # well above actual tile usage, safe on v5e/v6e/v7x


def _round_up(x, m):
    return ((x + m - 1) // m) * m


def _choose_tile(dim, cap, mult=8):
    """Largest tile <= cap (cap is a power of two) dividing `dim`; else fall back to padding."""
    if dim <= cap:
        return _round_up(dim, mult)
    t = cap
    while t > mult and dim % t:
        t //= 2
    return t if dim % t == 0 else cap


# ----------------------------- Pallas kernels -----------------------------

def _gemm_stats_kernel(a_ref, b_ref, bias_ref, y_ref, sum_ref, sq_ref):
    """Single-K GEMM with bias + fused BatchNorm statistics.

    y = A @ B + bias (stored bf16); per-column sum and sum-of-squares of the f32 result are
    accumulated into (1, tn) f32 outputs that stay resident across the (inner, sequential)
    M grid axis -- the separate BN stats pass over the activation is eliminated.
    """
    @pl.when(pl.program_id(1) == 0)
    def _():
        sum_ref[...] = jnp.zeros_like(sum_ref)
        sq_ref[...] = jnp.zeros_like(sq_ref)

    r = jnp.dot(a_ref[...], b_ref[...],
                preferred_element_type=jnp.float32) + bias_ref[...]
    sum_ref[...] += jnp.sum(r, axis=0, keepdims=True)
    sq_ref[...] += jnp.sum(r * r, axis=0, keepdims=True)
    y_ref[...] = r.astype(y_ref.dtype)


def _gemm_kernel(a_ref, b_ref, bias_ref, o_ref, *, act):
    """Single-K GEMM: o = act(A @ B + bias).  No accumulator scratch, no zero-fill."""
    r = jnp.dot(a_ref[...], b_ref[...],
                preferred_element_type=jnp.float32) + bias_ref[...]
    if act == "relu":
        r = jnp.maximum(r, 0.0)
    elif act == "sigmoid":
        r = jax.nn.sigmoid(r)
    o_ref[...] = r.astype(o_ref.dtype)


def _gemm_acc_kernel(a_ref, b_ref, bias_ref, o_ref, acc_ref, *, act):
    """Multi-K GEMM (only the deep fc layer needs this): f32 VMEM accumulation over K blocks."""
    @pl.when(pl.program_id(2) == 0)
    def _():
        acc_ref[...] = jnp.zeros_like(acc_ref)

    acc_ref[...] += jnp.dot(a_ref[...], b_ref[...],
                            preferred_element_type=jnp.float32)

    @pl.when(pl.program_id(2) == pl.num_programs(2) - 1)
    def _():
        r = acc_ref[...] + bias_ref[...]
        if act == "relu":
            r = jnp.maximum(r, 0.0)
        elif act == "sigmoid":
            r = jax.nn.sigmoid(r)
        o_ref[...] = r.astype(o_ref.dtype)


def _bn_apply_kernel(y_ref, sc_ref, sh_ref, o_ref):
    """Lane-dense BatchNorm scale/shift + ReLU: bf16 in/out, f32 math."""
    y = y_ref[...].astype(jnp.float32)
    o_ref[...] = jnp.maximum(y * sc_ref[...] + sh_ref[...], 0.0).astype(o_ref.dtype)


# ----------------------------- kernel wrappers -----------------------------

def pallas_gemm_stats(a, w, bias, out_dtype=jnp.bfloat16):
    """y = a @ w + bias plus fused per-column BN statistics (f32).

    a: (M, K) bf16 patches; w: (K, N) bf16 weight matrix (K is one full block, never padded);
    bias: (N,) f32.  Returns (y[:M] bf16, col_sum f32 (N,), col_sq f32 (N,)).
    """
    M, K = a.shape
    K2, N = w.shape
    assert K == K2
    tn = 256 if N % 256 == 0 else (128 if N % 128 == 0 else N)
    cap = 2048 if max(K, tn) <= 640 else 1024
    tm = _choose_tile(M, cap)
    Mp = _round_up(M, tm)

    a_p = a.astype(jnp.bfloat16)
    if Mp != M:
        a_p = jnp.pad(a_p, ((0, Mp - M), (0, 0)))
    bias_row = bias.astype(jnp.float32).reshape(1, N)

    y, s, sq = pl.pallas_call(
        _gemm_stats_kernel,
        out_shape=(jax.ShapeDtypeStruct((Mp, N), out_dtype),
                   jax.ShapeDtypeStruct((1, N), jnp.float32),
                   jax.ShapeDtypeStruct((1, N), jnp.float32)),
        grid_spec=pltpu.PrefetchScalarGridSpec(
            num_scalar_prefetch=0,
            grid=(N // tn, Mp // tm),                      # M innermost: stats stay resident
            in_specs=[pl.BlockSpec((tm, K), lambda j, i: (i, 0)),
                      pl.BlockSpec((K, tn), lambda j, i: (0, j)),
                      pl.BlockSpec((1, tn), lambda j, i: (0, j))],
            out_specs=(pl.BlockSpec((tm, tn), lambda j, i: (i, j)),
                       pl.BlockSpec((1, tn), lambda j, i: (0, j)),
                       pl.BlockSpec((1, tn), lambda j, i: (0, j)))),
        compiler_params=pltpu.CompilerParams(
            dimension_semantics=("parallel", "arbitrary"),
            vmem_limit_bytes=VMEM_LIMIT),
    )(a_p, w.astype(jnp.bfloat16), bias_row)

    col_sum, col_sq = s[0], sq[0]
    if Mp != M:
        # padded zero A-rows contribute exactly `bias` per column -- subtract analytically
        pad = jnp.float32(Mp - M)
        bf = bias.astype(jnp.float32)
        col_sum = col_sum - pad * bf
        col_sq = col_sq - pad * bf * bf
    return y[:M], col_sum, col_sq


def pallas_matmul(a, w, bias, act="none", out_dtype=jnp.bfloat16):
    """act(a @ w + bias).  Single-K fast path (no scratch) whenever K fits one block."""
    M, K = a.shape
    K2, N = w.shape
    assert K == K2

    if N % 128 == 0:
        tn = 128
        for cand in (4096, 2048, 1024, 512, 256):
            if N % cand == 0 and min(K, 4096) * cand * 2 <= (4 << 20):
                tn = cand
                break
    else:
        tn = N                                             # full-dim lane block (small N)
    tk = K if K <= 4096 else 4096
    cap = 2048 if max(tk, tn) <= 640 else 1024
    tm = _choose_tile(M, cap)
    Mp, Kp = _round_up(M, tm), _round_up(K, tk)

    a_p = a.astype(jnp.bfloat16)
    w_p = w.astype(jnp.bfloat16)
    if Mp != M or Kp != K:
        a_p = jnp.pad(a_p, ((0, Mp - M), (0, Kp - K)))
    if Kp != K:
        w_p = jnp.pad(w_p, ((0, Kp - K), (0, 0)))
    bias_row = bias.astype(jnp.float32).reshape(1, N)
    nk = Kp // tk

    if nk == 1:
        out = pl.pallas_call(
            functools.partial(_gemm_kernel, act=act),
            out_shape=jax.ShapeDtypeStruct((Mp, N), out_dtype),
            grid_spec=pltpu.PrefetchScalarGridSpec(
                num_scalar_prefetch=0,
                grid=(Mp // tm, N // tn),
                in_specs=[pl.BlockSpec((tm, Kp), lambda i, j: (i, 0)),
                          pl.BlockSpec((Kp, tn), lambda i, j: (0, j)),
                          pl.BlockSpec((1, tn), lambda i, j: (0, j))],
                out_specs=pl.BlockSpec((tm, tn), lambda i, j: (i, j))),
            compiler_params=pltpu.CompilerParams(
                dimension_semantics=("parallel", "parallel"),
                vmem_limit_bytes=VMEM_LIMIT),
        )(a_p, w_p, bias_row)
    else:
        out = pl.pallas_call(
            functools.partial(_gemm_acc_kernel, act=act),
            out_shape=jax.ShapeDtypeStruct((Mp, N), out_dtype),
            grid_spec=pltpu.PrefetchScalarGridSpec(
                num_scalar_prefetch=0,
                grid=(Mp // tm, N // tn, nk),
                in_specs=[pl.BlockSpec((tm, tk), lambda i, j, k: (i, k)),
                          pl.BlockSpec((tk, tn), lambda i, j, k: (k, j)),
                          pl.BlockSpec((1, tn), lambda i, j, k: (0, j))],
                out_specs=pl.BlockSpec((tm, tn), lambda i, j, k: (i, j)),
                scratch_shapes=[pltpu.VMEM((tm, tn), jnp.float32)]),
            compiler_params=pltpu.CompilerParams(
                dimension_semantics=("parallel", "parallel", "arbitrary"),
                vmem_limit_bytes=VMEM_LIMIT),
        )(a_p, w_p, bias_row)
    return out[:M]


def batchnorm_relu(y, col_sum, col_sq, gamma, beta, n_channels, count, eps=1e-5):
    """Training-mode BatchNorm2d (batch stats, biased var) + ReLU from pre-fused statistics.

    y: (M, N) bf16 where column c belongs to channel (c % n_channels); runs on a lane-dense
    (M*N/128, 128) view -- full 128-lane unmasked stores, bf16 in/out, f32 scale math.
    """
    M, N = y.shape
    C = n_channels
    assert N % C == 0 and 128 % C == 0 and (M * N) % 128 == 0, (M, N, C)

    ch_sum = col_sum.reshape(N // C, C).sum(axis=0)
    ch_sq = col_sq.reshape(N // C, C).sum(axis=0)
    mean = ch_sum / count
    var = jnp.maximum(ch_sq / count - mean * mean, 0.0)    # guard single-pass cancellation
    scale = gamma.astype(jnp.float32) * jax.lax.rsqrt(var + eps)
    shift = beta.astype(jnp.float32) - mean * scale
    scale_l = jnp.tile(scale, 128 // C).reshape(1, 128)
    shift_l = jnp.tile(shift, 128 // C).reshape(1, 128)

    R = (M * N) // 128
    tr = _choose_tile(R, 1024)
    Rp = _round_up(R, tr)
    y2 = y.reshape(R, 128)
    if Rp != R:
        y2 = jnp.pad(y2, ((0, Rp - R), (0, 0)))

    out = pl.pallas_call(
        _bn_apply_kernel,
        out_shape=jax.ShapeDtypeStruct((Rp, 128), y.dtype),
        grid=(Rp // tr,),
        in_specs=[pl.BlockSpec((tr, 128), lambda i: (i, 0)),
                  pl.BlockSpec((1, 128), lambda i: (0, 0)),
                  pl.BlockSpec((1, 128), lambda i: (0, 0))],
        out_specs=pl.BlockSpec((tr, 128), lambda i: (i, 0)),
        compiler_params=pltpu.CompilerParams(
            dimension_semantics=("parallel",),
            vmem_limit_bytes=VMEM_LIMIT),
    )(y2, scale_l, shift_l)
    return out[:R].reshape(M, N)


# ---------------- im2col / sub-pixel glue (bf16, fused by XLA under jit) ----------------
# TODO(synk): fuse im2col into the GEMM kernel via haloed input blocks / manual DMA to avoid
# materializing the 4x/9x-expanded patch arrays in HBM (review item #1).

def _im2col_conv(x, k=4, s=2, p=1):
    """Strided-conv patches: x NHWC bf16 -> (N*OH*OW, k*k*C), column order (kh, kw, ci)."""
    N, H, W, C = x.shape
    OH = (H + 2 * p - k) // s + 1
    OW = (W + 2 * p - k) // s + 1
    xp = jnp.pad(x, ((0, 0), (p, p), (p, p), (0, 0)))
    cols = [xp[:, kh:kh + s * (OH - 1) + 1:s, kw:kw + s * (OW - 1) + 1:s, :]
            for kh in range(k) for kw in range(k)]
    patches = jnp.stack(cols, axis=3)              # (N, OH, OW, k*k, C)
    return patches.reshape(N * OH * OW, k * k * C), (N, OH, OW)


def _im2col_3x3(x):
    """Stride-1 3x3 patches (pad 1): x NHWC bf16 -> (N*H*W, 9*C), column order (dy, dx, ci)."""
    N, H, W, C = x.shape
    xp = jnp.pad(x, ((0, 0), (1, 1), (1, 1), (0, 0)))
    cols = [xp[:, dy:dy + H, dx:dx + W, :] for dy in range(3) for dx in range(3)]
    patches = jnp.stack(cols, axis=3)              # (N, H, W, 9, C)
    return patches.reshape(N * H * W, 9 * C), (N, H, W)


def _convT_weight_matrix(w):
    """ConvTranspose2d(k=4,s=2,p=1) weight (Cin,Cout,4,4) -> (9*Cin, 4*Cout) matrix.

    Sub-pixel decomposition: output pixel (2m+ph, 2l+pw) is a stride-1 conv over a shared 3x3
    low-res neighbourhood, so all four phases run in ONE GEMM (columns ordered (ph, pw, co)).
    Per output phase: even rows: in[m-1]*W[3] + in[m]*W[1]; odd rows: in[m]*W[2] + in[m+1]*W[0].
    """
    cin, cout = w.shape[0], w.shape[1]
    sel = jnp.zeros((3, 2, 4), w.dtype)            # sel[neigh_offset, phase, kernel_tap]
    sel = sel.at[0, 0, 3].set(1.0)
    sel = sel.at[1, 0, 1].set(1.0)
    sel = sel.at[1, 1, 2].set(1.0)
    sel = sel.at[2, 1, 0].set(1.0)
    wm = jnp.einsum("apk,bqj,iokj->abipqo", sel, sel, w)   # (3,3,Cin,2,2,Cout)
    return wm.reshape(9 * cin, 4 * cout)


def _pixel_shuffle(y, n, h, w, cout):
    """(M, 4*Cout) phase columns (ph, pw, co) -> NHWC upsampled (n, 2h, 2w, cout)."""
    # TODO(synk): fold this transpose into the next layer's im2col indexing (review item #10).
    y = y.reshape(n, h, w, 2, 2, cout).transpose(0, 1, 3, 2, 4, 5)
    return y.reshape(n, 2 * h, 2 * w, cout)


# ----------------------------- parameters -----------------------------

def init_params(key, flatten):
    """All GEMM-ready weight matrices are pre-transposed / pre-packed / pre-cast to bf16 here."""
    keys = iter(jax.random.split(key, 64))

    def uniform(shape, bound):
        return jax.random.uniform(next(keys), shape, jnp.float32, -bound, bound)

    def conv_layer(cin, cout):
        # PyTorch default: U(-1/sqrt(fan_in), 1/sqrt(fan_in)), fan_in = cin*k*k
        bound = 1.0 / ((cin * 16) ** 0.5)
        w = uniform((cout, cin, 4, 4), bound)
        b = uniform((cout,), bound)
        wm = jnp.transpose(w, (2, 3, 1, 0)).reshape(16 * cin, cout).astype(jnp.bfloat16)
        return (wm, b, jnp.ones((cout,), jnp.float32), jnp.zeros((cout,), jnp.float32))

    def convT_layer(cin, cout, with_bn=True):
        # ConvTranspose2d fan_in = weight.size(1)*k*k = cout*16
        bound = 1.0 / ((cout * 16) ** 0.5)
        w = uniform((cin, cout, 4, 4), bound)
        b = uniform((cout,), bound)
        wm = _convT_weight_matrix(w).astype(jnp.bfloat16)
        b4 = jnp.tile(b, 4)
        if with_bn:
            return (wm, b4, jnp.ones((cout,), jnp.float32), jnp.zeros((cout,), jnp.float32))
        return (wm, b4)

    def lin(in_f, out_f, pad_k_to=None):
        bound = 1.0 / (in_f ** 0.5)
        w = uniform((in_f, out_f), bound)          # stored pre-transposed (in, out)
        b = uniform((out_f,), bound)
        if pad_k_to is not None and pad_k_to > in_f:
            w = jnp.pad(w, ((0, pad_k_to - in_f), (0, 0)))
        return (w.astype(jnp.bfloat16), b)

    p = {}
    enc_ch = [3, 8, 16, 32, 64, 128]
    p["enc"] = [conv_layer(enc_ch[i], enc_ch[i + 1]) for i in range(5)]
    p["cond1"] = lin(CONDITION_DIM, 128)
    p["cond2"] = lin(128, 256)

    in_f = flatten + 256
    pad_k = _round_up(in_f, 4096) if in_f > 4096 else None
    w_mu, b_mu = lin(in_f, LATENT_DIM, pad_k_to=pad_k)
    w_lv, b_lv = lin(in_f, LATENT_DIM, pad_k_to=pad_k)
    # fc_mu and fc_logvar fused into one GEMM (shared xc read, single launch).
    p["fc"] = (jnp.concatenate([w_mu, w_lv], axis=1),
               jnp.concatenate([b_mu, b_lv], axis=0))

    p["dec_in"] = lin(LATENT_DIM + CONDITION_DIM, flatten)
    dec_ch = [128, 64, 32, 16, 8, 3]
    p["dec"] = [convT_layer(dec_ch[i], dec_ch[i + 1], with_bn=(i < 4)) for i in range(5)]
    # TODO(synk): prior / prior_mean / prior_logvar are only used in vae_loss, not forward().
    return p


def pallas_linear(x, wb, act="none", out_dtype=jnp.bfloat16):
    w, b = wb
    kw = w.shape[0]
    assert x.shape[1] <= kw
    if x.shape[1] < kw:                            # weight stored with pre-padded K (deep fc)
        x = jnp.pad(x, ((0, 0), (0, kw - x.shape[1])))
    return pallas_matmul(x, w, b, act=act, out_dtype=out_dtype)


# ----------------------------- forward pass -----------------------------

def cvae_forward(params, x_nchw, c, eps):
    B, _, H, W = x_nchw.shape

    # -------- encode --------
    h = jnp.transpose(x_nchw, (0, 2, 3, 1)).astype(jnp.bfloat16)        # NCHW -> NHWC bf16
    for (wm, b, gamma, beta) in params["enc"]:
        cout = gamma.shape[0]
        patches, (n, oh, ow) = _im2col_conv(h)
        y, cs, cq = pallas_gemm_stats(patches, wm, b)
        y = batchnorm_relu(y, cs, cq, gamma, beta, cout, count=n * oh * ow)
        h = y.reshape(n, oh, ow, cout)
    h_flat = jnp.transpose(h, (0, 3, 1, 2)).reshape(B, -1)              # PyTorch NCHW flatten

    c1 = pallas_linear(c, params["cond1"], act="relu")                  # (B, 128) bf16
    c2 = pallas_linear(c1, params["cond2"], act="relu")                 # (B, 256) bf16
    xc = jnp.concatenate([h_flat, c2.astype(h_flat.dtype)], axis=1)
    mu_logvar = pallas_linear(xc, params["fc"], out_dtype=jnp.float32)  # fused fc_mu/fc_logvar
    mu = mu_logvar[:, :LATENT_DIM]
    logvar = mu_logvar[:, LATENT_DIM:]

    # -------- reparameterize (tiny, plain jnp, fused by XLA) --------
    z = mu + eps * jnp.exp(0.5 * logvar)

    # -------- decode --------
    zc = jnp.concatenate([z, c], axis=1)                                # (B, latent+cond)
    d = pallas_linear(zc, params["dec_in"])                             # (B, flatten) bf16
    d = d.reshape(B, 128, H // 32, W // 32)                             # PyTorch .view (NCHW)
    h = jnp.transpose(d, (0, 2, 3, 1))                                  # NHWC
    dec = params["dec"]
    for li, layer in enumerate(dec):
        last = li == len(dec) - 1
        patches, (n, hh, ww) = _im2col_3x3(h)
        if not last:
            wm, b4, gamma, beta = layer
            cout = gamma.shape[0]
            y, cs, cq = pallas_gemm_stats(patches, wm, b4)
            y = batchnorm_relu(y, cs, cq, gamma, beta, cout, count=4 * n * hh * ww)
        else:
            wm, b4 = layer
            cout = wm.shape[1] // 4
            y = pallas_matmul(patches, wm, b4, act="sigmoid", out_dtype=jnp.float32)
        h = _pixel_shuffle(y, n, hh, ww, cout)
    recon = jnp.transpose(h, (0, 3, 1, 2))                              # NCHW f32
    return recon, mu, logvar


# -------------------- correctness check for the convT decomposition --------------------

def _check_conv_transpose(key):
    """Validate the sub-pixel ConvTranspose2d(4,2,1) decomposition vs lax (review concern)."""
    cin, cout, hh, ww = 8, 4, 6, 10
    kx, kw, kb = jax.random.split(key, 3)
    x = jax.random.normal(kx, (1, hh, ww, cin), jnp.float32)
    w = jax.random.normal(kw, (cin, cout, 4, 4), jnp.float32) * 0.2
    b = jax.random.normal(kb, (cout,), jnp.float32) * 0.1

    x_r = x.astype(jnp.bfloat16)
    wm = _convT_weight_matrix(w).astype(jnp.bfloat16)
    patches, (n, h_, w_) = _im2col_3x3(x_r)
    y = pallas_matmul(patches, wm, jnp.tile(b, 4), act="none", out_dtype=jnp.float32)
    got = _pixel_shuffle(y, n, h_, w_, cout)

    # reference: transposed conv == stride-1 conv over the 2x-dilated input with flipped kernel
    wf = jnp.transpose(jnp.flip(w, axis=(2, 3)), (2, 3, 0, 1))           # HWIO
    want = jax.lax.conv_general_dilated(
        x_r.astype(jnp.float32), wf, window_strides=(1, 1), padding=((2, 2), (2, 2)),
        lhs_dilation=(2, 2), dimension_numbers=("NHWC", "HWIO", "NHWC")) + b
    err = float(jnp.max(jnp.abs(got - want)))
    assert err < 0.06, f"convT sub-pixel decomposition mismatch: max abs err {err}"


if __name__ == "__main__":
    key = jax.random.PRNGKey(0)
    k_param, k_x, k_c, k_eps, k_chk = jax.random.split(key, 5)

    _check_conv_transpose(k_chk)

    # Original module hard-codes flatten_size = 128*16*32 (3x512x1024 inputs).  The demo runs
    # the same architecture scaled down to 3x64x128 so the sandbox run stays fast.
    B, IMG_H, IMG_W = 2, 64, 128
    flatten = 128 * (IMG_H // 32) * (IMG_W // 32)

    x = jax.random.uniform(k_x, (B, 3, IMG_H, IMG_W), jnp.float32)
    c = jax.random.normal(k_c, (B, CONDITION_DIM), jnp.float32)
    eps = jax.random.normal(k_eps, (B, LATENT_DIM), jnp.float32)         # reparameterize noise

    params = init_params(k_param, flatten)
    fwd = jax.jit(cvae_forward)
    recon, mu, logvar = fwd(params, x, c, eps)
    jax.block_until_ready((recon, mu, logvar))

    assert recon.shape == (B, 3, IMG_H, IMG_W) and recon.dtype == jnp.float32
    assert mu.shape == (B, LATENT_DIM) and logvar.shape == (B, LATENT_DIM)
    assert bool(jnp.all(jnp.isfinite(recon)))
    assert bool(jnp.all((recon >= 0.0) & (recon <= 1.0)))                # sigmoid range
    print("KERNEL_OK")
</pallas_src>

<mosaic_0001>
module attributes {stable_mosaic.version = 11 : i64} {
  func.func @_gemm_kernel(%arg0: i32, %arg1: i32, %arg2: memref<64x72xbf16, #tpu.memory_space<vmem>>, %arg3: memref<72x16xbf16, #tpu.memory_space<vmem>>, %arg4: memref<1x16xf32, #tpu.memory_space<vmem>>, %arg5: memref<64x16xf32, #tpu.memory_space<vmem>>) attributes {dimension_semantics = [#tpu.dimension_semantics<parallel>, #tpu.dimension_semantics<parallel>], iteration_bounds = array<i64: 1, 1>, scalar_prefetch = 0 : i64, scratch_operands = 0 : i64, tpu.core_type = #tpu.core_type<tc>, window_params = [{transform_indices = @transform_0, window_bounds = array<i64: 64, 72>}, {transform_indices = @transform_1, window_bounds = array<i64: 72, 16>}, {transform_indices = @transform_2, window_bounds = array<i64: 1, 16>}, {transform_indices = @transform_3, window_bounds = array<i64: 64, 16>}]} {
    %c0 = arith.constant 0 : index
    %c0_0 = arith.constant 0 : index
    %0 = vector.load %arg2[%c0, %c0_0] : memref<64x72xbf16, #tpu.memory_space<vmem>>, vector<64x72xbf16>
    %c0_1 = arith.constant 0 : index
    %c0_2 = arith.constant 0 : index
    %1 = vector.load %arg3[%c0_1, %c0_2] : memref<72x16xbf16, #tpu.memory_space<vmem>>, vector<72x16xbf16>
    %cst = arith.constant dense<0.000000e+00> : vector<64x16xf32>
    %2 = tpu.matmul %0, %1, %cst {dimension_numbers = #tpu.dot_dimension_numbers<[1], [0], [0], [1], [0, 0, 1, 1], [], []>} : vector<64x72xbf16>, vector<72x16xbf16>, vector<64x16xf32> -> vector<64x16xf32>
    %c0_3 = arith.constant 0 : index
    %c0_4 = arith.constant 0 : index
    %3 = vector.load %arg4[%c0_3, %c0_4] : memref<1x16xf32, #tpu.memory_space<vmem>>, vector<1x16xf32>
    %4 = vector.broadcast %3 : vector<1x16xf32> to vector<64x16xf32>
    %5 = arith.addf %2, %4 : vector<64x16xf32>
    %c0_5 = arith.constant 0 : index
    %c0_6 = arith.constant 0 : index
    %6 = vector.load %arg5[%c0_5, %c0_6] : memref<64x16xf32, #tpu.memory_space<vmem>>, vector<64x16xf32>
    tpu.vector_store %arg5[%c0_5, %c0_6], %5 {strides = array<i32>} : memref<64x16xf32, #tpu.memory_space<vmem>>, vector<64x16xf32>,
    return
  }
  func.func @transform_0(%arg0: i32, %arg1: i32) -> (i32, i32) {
    %c0_i32 = arith.constant 0 : i32
    %c0_i32_0 = arith.constant 0 : i32
    return %arg0, %c0_i32 : i32, i32
  }
  func.func @transform_1(%arg0: i32, %arg1: i32) -> (i32, i32) {
    %c0_i32 = arith.constant 0 : i32
    %c0_i32_0 = arith.constant 0 : i32
    return %c0_i32, %arg1 : i32, i32
  }
  func.func @transform_2(%arg0: i32, %arg1: i32) -> (i32, i32) {
    %c0_i32 = arith.constant 0 : i32
    %c0_i32_0 = arith.constant 0 : i32
    return %c0_i32, %arg1 : i32, i32
  }
  func.func @transform_3(%arg0: i32, %arg1: i32) -> (i32, i32) {
    %c0_i32 = arith.constant 0 : i32
    return %arg0, %arg1 : i32, i32
  }
}

</mosaic_0001>

<llo_original>
// kernel: tpu_custom_call.1
$region0: #{tpu_custom_call.1}
  #allocation0 [shape = 'u32[]', space=smem, size = 0x4, offset = 0x4, fixed_abs, tag = 'smem constant byte address 0x4 - core index']
  #allocation1 [shape = 'u32[144,128]{1,0:T(1,128)}', space=vmem, size = 0x12000, scoped, tag = 'internal scratch']
  %s0 = inlined_call_operand.vmem [shape: bf16[64,72], index: 0, kind: input, shape index: {}]
  %s1 = inlined_call_operand.vmem [shape: bf16[72,16], index: 1, kind: input, shape index: {}]
  %s2 = inlined_call_operand.vmem [shape: f32[1,16], index: 2, kind: input, shape index: {}]
  %s3 = inlined_call_operand.vmem [shape: f32[64,16], index: 3, kind: output, shape index: {}]
  %s4 = sld [smem:[#allocation0]]
  $region22: #{tpu_custom_call.1} parent=0
    _
  %s6 = ssub.s32 1, %s4
  %s7 = scalar_select 0, %s6, %s4
  // Predicated region
  $region2: #{tpu_custom_call.1} parent=0 // pred_check
    _
  $region3: #{tpu_custom_call.1} parent=0 // pred_check_branch
    %9 = sbr.rel (0) target = $region5
  $region4: #{tpu_custom_call.1} parent=0 // pred_region
    _
  $region5: #{tpu_custom_call.1} parent=0 // pred_fallthru
    _
  // Predicated region
  $region6: #{tpu_custom_call.1} parent=0 // pred_check
    _
  $region7: #{tpu_custom_call.1} parent=0 // pred_check_branch
    %11 = sbr.rel (0) target = $region9
  $region8: #{tpu_custom_call.1} parent=0 // pred_region
    _
  $region9: #{tpu_custom_call.1} parent=0 // pred_fallthru
    _
  // Predicated region
  $region10: #{tpu_custom_call.1} parent=0 // pred_check
    _
  $region11: #{tpu_custom_call.1} parent=0 // pred_check_branch
    %13 = sbr.rel (0) target = $region13
  $region12: #{tpu_custom_call.1} parent=0 // pred_region
    _
  $region13: #{tpu_custom_call.1} parent=0 // pred_fallthru
    _
  %v15 = vld [vmem:[%s0] sm:$0xf]
  %v16 = vld [vmem:[%s0 + $0x4] sm:$0xf]
  %v17 = vld [vmem:[%s0 + $0x8] sm:$0xf]
  %v18 = vld [vmem:[%s0 + $0xc] sm:$0xf]
  %v19 = vld [vmem:[%s0 + $0x10] sm:$0xf]
  %v20 = vld [vmem:[%s0 + $0x14] sm:$0xf]
  %v21 = vld [vmem:[%s0 + $0x18] sm:$0xf]
  %v22 = vld [vmem:[%s0 + $0x1c] sm:$0xf]
  %v23 = vld [vmem:[%s1] sm:$0xf]
  %v24 = vld [vmem:[%s1 + $0x4] sm:$0xf]
  %v25 = vld [vmem:[%s1 + $0x8] sm:$0xf]
  %v26 = vld [vmem:[%s1 + $0xc] sm:$0xf]
  %v27 = vld [vmem:[%s1 + $0x10] sm:$0xf]
  %v28 = vld [vmem:[%s1 + $0x14] sm:$0xf]
  %v29 = vld [vmem:[%s1 + $0x18] sm:$0xf]
  %v30 = vld [vmem:[%s1 + $0x1c] sm:$0xf]
  %v31 = vld [vmem:[%s1 + $0x20] sm:$0xf]
  %v32 = vld [vmem:[%s2] sm:$0x1]
  %v34 = vlaneseq
  %v35 = vshrl.u32 %v34, 7
  %v36 = vsub.s32 0, %v35
  %v37 = vrot.slane %v32, %v36
  %v47 = vunpack.c.l.b16 %v15
  %v48 = vunpack.c.l.b16 %v16
  %v49 = vunpack.c.l.b16 %v17
  %v50 = vunpack.c.l.b16 %v18
  %v51 = vunpack.c.l.b16 %v19
  %v52 = vunpack.c.l.b16 %v20
  %v53 = vunpack.c.l.b16 %v21
  %v54 = vunpack.c.l.b16 %v22
  %v55 = vpack.c.b16 %v48, %v47
  %v56 = vpack.c.b16 %v50, %v49
  %v57 = vpack.c.b16 %v52, %v51
  %v58 = vpack.c.b16 %v54, %v53
  %v68 = vunpack.c.l.b16 %v23
  %v69 = vunpack.c.l.b16 %v24
  %v70 = vunpack.c.l.b16 %v25
  %v71 = vunpack.c.l.b16 %v26
  %v72 = vunpack.c.l.b16 %v27
  %v73 = vunpack.c.l.b16 %v28
  %v74 = vunpack.c.l.b16 %v29
  %v75 = vunpack.c.l.b16 %v30
  %v76 = vunpack.c.l.b16 %v31
  %v77 = vpack.c.b16 %v69, %v68
  %v78 = vpack.c.b16 %v71, %v70
  %v79 = vpack.c.b16 %v73, %v72
  %v80 = vpack.c.b16 %v75, %v74
  %v81 = vpack.c.b16 %v76, %v76
  %vm86 = vcmask 588800
  %v88 = vsel %vm86, %v55, 0
  %v91 = vsel %vm86, %v56, 0
  %v94 = vsel %vm86, %v57, 0
  %v97 = vsel %vm86, %v58, 0
  %vm99 = vcmask 1043456
  %v101 = vsel %vm99, %v81, 0
  %103 = vmatprep.subr.bf16.mxu0 0
  %104 = vmatpush1.bf16.msra.mxu0 %v77
  %105 = vmatprep.subr.bf16.mxu0 0
  %106 = vmatpush1.bf16.msra.mxu0 %v78
  %107 = vmatprep.subr.bf16.mxu0 0
  %108 = vmatpush1.bf16.msra.mxu0 %v79
  %109 = vmatprep.subr.bf16.mxu0 0
  %110 = vmatpush1.bf16.msra.mxu0 %v80
  %111 = vmatprep.subr.bf16.mxu0 0
  %112 = vmatpush1.bf16.msra.mxu0 %v101
  %113 = vmatprep.subr.bf16.mxu0 0
  %114 = vmatpush1.bf16.msra.mxu0 0
  %115 = vmatprep.subr.bf16.mxu0 0
  %116 = vmatpush1.bf16.msra.mxu0 0
  %117 = vmatprep.subr.bf16.mxu0 0
  %118 = vmatpush1.bf16.msra.mxu0 0
  %119 = vmatprep.subr.bf16.mxu0 0
  %120 = vmatpush1.bf16.msra.mxu0 0
  %121 = vmatprep.subr.bf16.mxu0 0
  %122 = vmatpush1.bf16.msra.mxu0 0
  %123 = vmatprep.subr.bf16.mxu0 0
  %124 = vmatpush1.bf16.msra.mxu0 0
  %125 = vmatprep.subr.bf16.mxu0 0
  %126 = vmatpush1.bf16.msra.mxu0 0
  %127 = vmatprep.subr.bf16.mxu0 0
  %128 = vmatpush1.bf16.msra.mxu0 0
  %129 = vmatprep.subr.bf16.mxu0 0
  %130 = vmatpush1.bf16.msra.mxu0 0
  %131 = vmatprep.subr.bf16.mxu0 0
  %132 = vmatpush1.bf16.msra.mxu0 0
  %133 = vmatprep.subr.bf16.mxu0 0
  %134 = vmatpush1.bf16.msra.mxu0 0
  %135 = vmatprep.mubr.bf16.mxu0 0
  %136 = vmatmul.mubr.bf16.gmra.mrb[0].mxu0 %v88
  %v137 = vpop.f32.mrb[0].mxu0
  %v138 = vadd.f32 %v37, %v137
  %v139 = vpop.f32.mrb[0].mxu0
  %v140 = vpop.f32.mrb[0].mxu0
  %v141 = vadd.f32 %v37, %v140
  %v142 = vpop.f32.mrb[0].mxu0
  %143 = vmatprep.mubr.bf16.mxu0 0
  %144 = vmatmul.mubr.bf16.gmra.mrb[0].mxu0 %v91
  %v145 = vpop.f32.mrb[0].mxu0
  %v146 = vadd.f32 %v37, %v145
  %v147 = vpop.f32.mrb[0].mxu0
  %v148 = vpop.f32.mrb[0].mxu0
  %v149 = vadd.f32 %v37, %v148
  %v150 = vpop.f32.mrb[0].mxu0
  %151 = vmatprep.mubr.bf16.mxu0 0
  %152 = vmatmul.mubr.bf16.gmra.mrb[0].mxu0 %v94
  %v153 = vpop.f32.mrb[0].mxu0
  %v154 = vadd.f32 %v37, %v153
  %v155 = vpop.f32.mrb[0].mxu0
  %v156 = vpop.f32.mrb[0].mxu0
  %v157 = vadd.f32 %v37, %v156
  %v158 = vpop.f32.mrb[0].mxu0
  %159 = vmatprep.mubr.bf16.mxu0 0
  %160 = vmatmul.mubr.bf16.gmra.mrb[0].mxu0 %v97
  %v161 = vpop.f32.mrb[0].mxu0
  %v162 = vadd.f32 %v37, %v161
  %v163 = vpop.f32.mrb[0].mxu0
  %v164 = vpop.f32.mrb[0].mxu0
  %v165 = vadd.f32 %v37, %v164
  %v166 = vpop.f32.mrb[0].mxu0
  %167 = vdwg.mxu0
  %vm168 = vcmask 130048
  %169 = vst.msk [vmem:[%s3] sm:$0xff] %vm168, %v138
  %170 = vst.msk [vmem:[%s3 + $0x8] sm:$0xff] %vm168, %v141
  %171 = vst.msk [vmem:[%s3 + $0x10] sm:$0xff] %vm168, %v146
  %172 = vst.msk [vmem:[%s3 + $0x18] sm:$0xff] %vm168, %v149
  %173 = vst.msk [vmem:[%s3 + $0x20] sm:$0xff] %vm168, %v154
  %174 = vst.msk [vmem:[%s3 + $0x28] sm:$0xff] %vm168, %v157
  %175 = vst.msk [vmem:[%s3 + $0x30] sm:$0xff] %vm168, %v162
  %176 = vst.msk [vmem:[%s3 + $0x38] sm:$0xff] %vm168, %v165
  // Predicated region
  $region14: #{tpu_custom_call.1} parent=0 // pred_check
    _
  $region15: #{tpu_custom_call.1} parent=0 // pred_check_branch
    %178 = sbr.rel (0) target = $region17
  $region16: #{tpu_custom_call.1} parent=0 // pred_region
    _
  $region17: #{tpu_custom_call.1} parent=0 // pred_fallthru
    _
  // Predicated region
  $region18: #{tpu_custom_call.1} parent=0 // pred_check
    _
  $region19: #{tpu_custom_call.1} parent=0 // pred_check_branch
    %180 = sbr.rel (0) target = $region21
  $region20: #{tpu_custom_call.1} parent=0 // pred_region
    _
  $region21: #{tpu_custom_call.1} parent=0 // pred_fallthru
    _

</llo_original>
